<compile_context>
chip_gen: v5e
topology: v5e:2x2
jax: 0.10.0
libtpu: 0.0.40
codegen_flags: <defaults>
</compile_context>

<pallas_src>
import jax
import jax.numpy as jnp
from jax import lax
from jax.experimental import pallas as pl
from jax.experimental.pallas import tpu as pltpu

# ---------------- configuration (EncoderBlock(8, 16, stride=2, dilations=(1, 3))) -------------
IN_CH = 8
OUT_CH = 16
STRIDE = 2
DILATIONS = (1, 3)
UNIT_K = 3                                   # unit_kernel_size
B = 2
T = 32

KF = 3 if STRIDE == 1 else 2 * STRIDE        # final conv kernel size
PADF = (KF - 1) // 2                         # final conv padding (Conv1d wrapper default)
T_OUT = (T + 2 * PADF - KF) // STRIDE + 1
NU = len(DILATIONS)

# ---- static conv tap shifts (within-sequence time offsets) ----
_UNIT_SHIFTS = tuple(tuple((k - (UNIT_K - 1) // 2) * d for k in range(UNIT_K))
                     for d in DILATIONS)
_FINAL_SHIFTS = tuple(k - PADF for k in range(KF))
_NONZERO_SHIFTS = tuple(sorted(
    ({s for ss in _UNIT_SHIFTS for s in ss} | set(_FINAL_SHIFTS)) - {0}))
# A single halo mask per shift only zeroes one sequence boundary; valid iff the
# conv reach stays below the sequence length.
assert all(abs(s) < T for s in _NONZERO_SHIFTS), "conv shift magnitude must be < T"

# ---- packed parameter buffer layout (one bf16, 128-lane-padded DMA) ----
_ROW_ALIGN = 32                              # multiple of the bf16 sublane pack (16)


def _aligned_offsets(sizes, align):
    offs, cur = [], 0
    for s in sizes:
        offs.append(cur)
        cur += -(-s // align) * align
    return tuple(offs), cur


_P_SIZES = [UNIT_K * IN_CH] * NU + [IN_CH] * NU + [KF * IN_CH, T_OUT, 1]
_P_OFFS, P_ROWS = _aligned_offsets(_P_SIZES, _ROW_ALIGN)
_OFF_W1 = _P_OFFS[:NU]                       # (UNIT_K*IN_CH, IN_CH) per unit
_OFF_W2 = _P_OFFS[NU:2 * NU]                 # (IN_CH, IN_CH)        per unit
_OFF_WF = _P_OFFS[2 * NU]                    # (KF*IN_CH, OUT_CH)
_OFF_SEL = _P_OFFS[2 * NU + 1]               # (T_OUT, T) 0/1 stride-selection matrix
_OFF_B = _P_OFFS[2 * NU + 2]                 # (1, OUT_CH) bias
P_COLS = 128
assert max(IN_CH, OUT_CH, T) <= P_COLS


def _elu(v):
    # torch.nn.ELU(alpha=1.0); exp only ever sees non-positive inputs, so the
    # discarded branch of the select cannot produce inf.
    return jnp.where(v > 0, v, jnp.exp(jnp.minimum(v, 0.0)) - 1.0)


def encoder_block_kernel(x_ref, p_ref, out_ref):
    # x_ref  : (T, IN_CH)        one batch element; time on sublanes, channels on lanes
    # p_ref  : (P_ROWS, P_COLS)  bf16: all conv weights + stride-selection + bias
    # out_ref: (T_OUT, OUT_CH)
    x = x_ref[...]                                                     # f32

    # ---- hoisted halo masks: exactly one compare per distinct static shift ----
    t_idx = lax.broadcasted_iota(jnp.int32, (T, IN_CH), 0)
    halo = {s: (t_idx < T - s) if s > 0 else (t_idx >= -s) for s in _NONZERO_SHIFTS}

    def tap(a, s):
        # a[t] -> a[t + s], zero-padded at the sequence boundary.
        if s == 0:
            return a
        sp = s % T
        z = jnp.concatenate([a[sp:], a[:sp]], axis=0)                  # sublane rotate
        return jnp.where(halo[s], z, 0.0)

    def w1(u):
        return p_ref[_OFF_W1[u]:_OFF_W1[u] + UNIT_K * IN_CH, :IN_CH]   # bf16 (K*Cin, Cin)

    def w2(u):
        return p_ref[_OFF_W2[u]:_OFF_W2[u] + IN_CH, :IN_CH]            # bf16 (Cin, Cin)

    # ---- residual units (statically unrolled); one fused im2col matmul per conv ----
    for u in range(NU):
        a = _elu(x)
        cols = jnp.concatenate([tap(a, s) for s in _UNIT_SHIFTS[u]], axis=-1)   # (T, K*Cin)
        y = jnp.dot(cols.astype(jnp.bfloat16), w1(u),
                    preferred_element_type=jnp.float32)                # (T, Cin), f32 accum
        x = x + jnp.dot(_elu(y).astype(jnp.bfloat16), w2(u),
                        preferred_element_type=jnp.float32)

    # ---- final conv (kernel KF, stride STRIDE, padding PADF, bias) ----
    wf = p_ref[_OFF_WF:_OFF_WF + KF * IN_CH, :OUT_CH]                  # bf16 (KF*Cin, Cout)
    cols_f = jnp.concatenate([tap(x, s) for s in _FINAL_SHIFTS], axis=-1)        # (T, KF*Cin)
    full = jnp.dot(cols_f.astype(jnp.bfloat16), wf,
                   preferred_element_type=jnp.float32)                 # stride-1 result (T, Cout)
    if STRIDE == 1:
        acc = full
    else:
        # Trace-time 0/1 selection matrix (packed with the weights) picks rows
        # t = to*STRIDE on the MXU — no in-kernel iota/div/mod construction.
        sel = p_ref[_OFF_SEL:_OFF_SEL + T_OUT, :T].astype(jnp.float32)
        acc = jnp.dot(sel, full, preferred_element_type=jnp.float32)   # (T_OUT, Cout)
    bias = p_ref[_OFF_B:_OFF_B + 1, :OUT_CH].astype(jnp.float32)       # (1, Cout)
    out_ref[...] = acc + bias


def encoder_block_pallas(x_btc, params):
    # x_btc: (B, T, IN_CH) f32 ; params: (P_ROWS, P_COLS) bf16 packed parameters
    return pl.pallas_call(
        encoder_block_kernel,
        out_shape=jax.ShapeDtypeStruct((B, T_OUT, OUT_CH), jnp.float32),
        grid=(B,),
        in_specs=[
            pl.BlockSpec((None, T, IN_CH), lambda b: (b, 0, 0)),        # per-batch block
            pl.BlockSpec((P_ROWS, P_COLS), lambda b: (0, 0)),           # fetched once
        ],
        out_specs=pl.BlockSpec((None, T_OUT, OUT_CH), lambda b: (b, 0, 0)),
        compiler_params=pltpu.CompilerParams(dimension_semantics=("parallel",)),
    )(x_btc, params)


def pack_params(w1_t, w2_t, wf_t, bf):
    """Pack all parameters (given in PyTorch layouts) into one bf16 128-lane buffer."""
    w1f = jnp.transpose(w1_t, (0, 3, 2, 1)).reshape(NU, UNIT_K * IN_CH, IN_CH)  # (NU, K*Cin, Cin)
    w2 = jnp.transpose(w2_t[..., 0], (0, 2, 1))                                 # (NU, Cin, Cin)
    wff = jnp.transpose(wf_t, (2, 1, 0)).reshape(KF * IN_CH, OUT_CH)            # (KF*Cin, Cout)
    sel = (jnp.arange(T)[None, :] == (STRIDE * jnp.arange(T_OUT))[:, None])     # (T_OUT, T) 0/1
    p = jnp.zeros((P_ROWS, P_COLS), jnp.float32)
    for u in range(NU):
        p = p.at[_OFF_W1[u]:_OFF_W1[u] + UNIT_K * IN_CH, :IN_CH].set(w1f[u])
        p = p.at[_OFF_W2[u]:_OFF_W2[u] + IN_CH, :IN_CH].set(w2[u])
    p = p.at[_OFF_WF:_OFF_WF + KF * IN_CH, :OUT_CH].set(wff)
    p = p.at[_OFF_SEL:_OFF_SEL + T_OUT, :T].set(sel.astype(jnp.float32))
    p = p.at[_OFF_B, :OUT_CH].set(bf)
    return p.astype(jnp.bfloat16)   # 0/1 sel stays exact; bias rounding ~1e-4


# ---------------- pure-JAX reference (PyTorch-layout weights, NCT activations) ----------------
def ref_forward(x_nct, w1_t, w2_t, wf_t, bf):
    dn = ("NCH", "OIH", "NCH")
    hp = lax.Precision.HIGHEST
    x = x_nct
    for u, d in enumerate(DILATIONS):
        pad = (UNIT_K - 1) // 2 * d
        a = jax.nn.elu(x)
        y = lax.conv_general_dilated(a, w1_t[u], (1,), [(pad, pad)],
                                     rhs_dilation=(d,), dimension_numbers=dn, precision=hp)
        y2 = lax.conv_general_dilated(jax.nn.elu(y), w2_t[u], (1,), [(0, 0)],
                                      dimension_numbers=dn, precision=hp)
        x = x + y2
    y = lax.conv_general_dilated(x, wf_t, (STRIDE,), [(PADF, PADF)],
                                 dimension_numbers=dn, precision=hp)
    return y + bf[None, :, None]


if __name__ == "__main__":
    key = jax.random.PRNGKey(0)
    ks = jax.random.split(key, 5)

    # PyTorch-layout inputs / parameters (deterministic, synthetic)
    x_nct = jax.random.normal(ks[0], (B, IN_CH, T), jnp.float32)                     # (B, C, T)
    w1_t = 0.2 * jax.random.normal(ks[1], (NU, IN_CH, IN_CH, UNIT_K), jnp.float32)   # (O, I, K)
    w2_t = 0.2 * jax.random.normal(ks[2], (NU, IN_CH, IN_CH, 1), jnp.float32)        # 1x1 conv
    wf_t = 0.2 * jax.random.normal(ks[3], (OUT_CH, IN_CH, KF), jnp.float32)          # final conv
    bf = 0.1 * jax.random.normal(ks[4], (OUT_CH,), jnp.float32)                      # final bias

    x_btc = jnp.transpose(x_nct, (0, 2, 1))           # (B, T, Cin): time on sublanes
    params = pack_params(w1_t, w2_t, wf_t, bf)        # single packed parameter DMA

    out = encoder_block_pallas(x_btc, params)         # (B, T_OUT, Cout)
    out = jax.block_until_ready(out)

    ref = ref_forward(x_nct, w1_t, w2_t, wf_t, bf)
    out_nct = jnp.transpose(out, (0, 2, 1))           # back to PyTorch (B, C_out, T_out)
    assert out_nct.shape == (B, OUT_CH, T_OUT), out_nct.shape
    err = float(jnp.max(jnp.abs(out_nct - ref)))
    # Conv matmuls use bf16 operands with f32 accumulation (per v6e/v7x guidance);
    # expected max-abs error vs the f32 HIGHEST-precision reference is ~1e-2 here.
    if err < 3e-2:
        print("KERNEL_OK")
    else:
        print(f"MAX_ABS_ERR={err}")
</pallas_src>

<mosaic_0001>
module attributes {stable_mosaic.version = 11 : i64} {
  func.func @encoder_block_kernel(%arg0: i32, %arg1: memref<1x32x8xf32, #tpu.memory_space<vmem>>, %arg2: memref<224x128xbf16, #tpu.memory_space<vmem>>, %arg3: memref<1x16x16xf32, #tpu.memory_space<vmem>>) attributes {dimension_semantics = [#tpu.dimension_semantics<parallel>], iteration_bounds = array<i64: 2>, scalar_prefetch = 0 : i64, scratch_operands = 0 : i64, tpu.core_type = #tpu.core_type<tc>, window_params = [{transform_indices = @transform_0, window_bounds = array<i64: 1, 32, 8>}, {pipeline_mode = #tpu.pipeline_mode<synchronous>, transform_indices = @transform_1, window_bounds = array<i64: 224, 128>}, {transform_indices = @transform_2, window_bounds = array<i64: 1, 16, 16>}]} {
    %c0 = arith.constant 0 : index
    %c0_0 = arith.constant 0 : index
    %c0_1 = arith.constant 0 : index
    %0 = vector.load %arg1[%c0, %c0_0, %c0_1] : memref<1x32x8xf32, #tpu.memory_space<vmem>>, vector<1x32x8xf32>
    %1 = vector.shape_cast %0 : vector<1x32x8xf32> to vector<32x8xf32>
    %2 = tpu.iota {dimensions = array<i32: 0>} : vector<32x8xi32>
    %c3_i32 = arith.constant 3 : i32
    %3 = vector.broadcast %c3_i32 : i32 to vector<32x8xi32>
    %4 = arith.cmpi sge, %2, %3 : vector<32x8xi32>
    %c1_i32 = arith.constant 1 : i32
    %5 = vector.broadcast %c1_i32 : i32 to vector<32x8xi32>
    %6 = arith.cmpi sge, %2, %5 : vector<32x8xi32>
    %c31_i32 = arith.constant 31 : i32
    %7 = vector.broadcast %c31_i32 : i32 to vector<32x8xi32>
    %8 = arith.cmpi slt, %2, %7 : vector<32x8xi32>
    %c30_i32 = arith.constant 30 : i32
    %9 = vector.broadcast %c30_i32 : i32 to vector<32x8xi32>
    %10 = arith.cmpi slt, %2, %9 : vector<32x8xi32>
    %c29_i32 = arith.constant 29 : i32
    %11 = vector.broadcast %c29_i32 : i32 to vector<32x8xi32>
    %12 = arith.cmpi slt, %2, %11 : vector<32x8xi32>
    %cst = arith.constant 0.000000e+00 : f32
    %13 = vector.broadcast %cst : f32 to vector<32x8xf32>
    %14 = arith.cmpf ogt, %1, %13 : vector<32x8xf32>
    %cst_2 = arith.constant 0.000000e+00 : f32
    %15 = vector.broadcast %cst_2 : f32 to vector<32x8xf32>
    %16 = arith.minimumf %1, %15 : vector<32x8xf32>
    %17 = math.exp %16 : vector<32x8xf32>
    %cst_3 = arith.constant 1.000000e+00 : f32
    %18 = vector.broadcast %cst_3 : f32 to vector<32x8xf32>
    %19 = arith.subf %17, %18 : vector<32x8xf32>
    %20 = arith.select %14, %1, %19 : vector<32x8xi1>, vector<32x8xf32>
    %21 = vector.extract_strided_slice %20 {offsets = [31, 0], sizes = [1, 8], strides = [1, 1]} : vector<32x8xf32> to vector<1x8xf32>
    %22 = vector.extract_strided_slice %20 {offsets = [0, 0], sizes = [31, 8], strides = [1, 1]} : vector<32x8xf32> to vector<31x8xf32>
    %23 = tpu.concatenate %21, %22 in 0 : vector<1x8xf32>, vector<31x8xf32> -> vector<32x8xf32>
    %cst_4 = arith.constant 0.000000e+00 : f32
    %24 = vector.broadcast %cst_4 : f32 to vector<32x8xf32>
    %25 = arith.select %6, %23, %24 : vector<32x8xi1>, vector<32x8xf32>
    %26 = vector.extract_strided_slice %20 {offsets = [1, 0], sizes = [31, 8], strides = [1, 1]} : vector<32x8xf32> to vector<31x8xf32>
    %27 = vector.extract_strided_slice %20 {offsets = [0, 0], sizes = [1, 8], strides = [1, 1]} : vector<32x8xf32> to vector<1x8xf32>
    %28 = tpu.concatenate %26, %27 in 0 : vector<31x8xf32>, vector<1x8xf32> -> vector<32x8xf32>
    %cst_5 = arith.constant 0.000000e+00 : f32
    %29 = vector.broadcast %cst_5 : f32 to vector<32x8xf32>
    %30 = arith.select %8, %28, %29 : vector<32x8xi1>, vector<32x8xf32>
    %31 = tpu.concatenate %25, %20, %30 in 1 : vector<32x8xf32>, vector<32x8xf32>, vector<32x8xf32> -> vector<32x24xf32>
    %32 = arith.truncf %31 : vector<32x24xf32> to vector<32x24xbf16>
    %c0_6 = arith.constant 0 : index
    %c0_7 = arith.constant 0 : index
    %33 = vector.load %arg2[%c0_6, %c0_7] : memref<224x128xbf16, #tpu.memory_space<vmem>>, vector<24x8xbf16>
    %cst_8 = arith.constant dense<0.000000e+00> : vector<32x8xf32>
    %34 = tpu.matmul %32, %33, %cst_8 {dimension_numbers = #tpu.dot_dimension_numbers<[1], [0], [0], [1], [0, 0, 1, 1], [], []>} : vector<32x24xbf16>, vector<24x8xbf16>, vector<32x8xf32> -> vector<32x8xf32>
    %cst_9 = arith.constant 0.000000e+00 : f32
    %35 = vector.broadcast %cst_9 : f32 to vector<32x8xf32>
    %36 = arith.cmpf ogt, %34, %35 : vector<32x8xf32>
    %cst_10 = arith.constant 0.000000e+00 : f32
    %37 = vector.broadcast %cst_10 : f32 to vector<32x8xf32>
    %38 = arith.minimumf %34, %37 : vector<32x8xf32>
    %39 = math.exp %38 : vector<32x8xf32>
    %cst_11 = arith.constant 1.000000e+00 : f32
    %40 = vector.broadcast %cst_11 : f32 to vector<32x8xf32>
    %41 = arith.subf %39, %40 : vector<32x8xf32>
    %42 = arith.select %36, %34, %41 : vector<32x8xi1>, vector<32x8xf32>
    %43 = arith.truncf %42 : vector<32x8xf32> to vector<32x8xbf16>
    %c64 = arith.constant 64 : index
    %c0_12 = arith.constant 0 : index
    %44 = vector.load %arg2[%c64, %c0_12] : memref<224x128xbf16, #tpu.memory_space<vmem>>, vector<8x8xbf16>
    %cst_13 = arith.constant dense<0.000000e+00> : vector<32x8xf32>
    %45 = tpu.matmul %43, %44, %cst_13 {dimension_numbers = #tpu.dot_dimension_numbers<[1], [0], [0], [1], [0, 0, 1, 1], [], []>} : vector<32x8xbf16>, vector<8x8xbf16>, vector<32x8xf32> -> vector<32x8xf32>
    %46 = arith.addf %1, %45 : vector<32x8xf32>
    %cst_14 = arith.constant 0.000000e+00 : f32
    %47 = vector.broadcast %cst_14 : f32 to vector<32x8xf32>
    %48 = arith.cmpf ogt, %46, %47 : vector<32x8xf32>
    %cst_15 = arith.constant 0.000000e+00 : f32
    %49 = vector.broadcast %cst_15 : f32 to vector<32x8xf32>
    %50 = arith.minimumf %46, %49 : vector<32x8xf32>
    %51 = math.exp %50 : vector<32x8xf32>
    %cst_16 = arith.constant 1.000000e+00 : f32
    %52 = vector.broadcast %cst_16 : f32 to vector<32x8xf32>
    %53 = arith.subf %51, %52 : vector<32x8xf32>
    %54 = arith.select %48, %46, %53 : vector<32x8xi1>, vector<32x8xf32>
    %55 = vector.extract_strided_slice %54 {offsets = [29, 0], sizes = [3, 8], strides = [1, 1]} : vector<32x8xf32> to vector<3x8xf32>
    %56 = vector.extract_strided_slice %54 {offsets = [0, 0], sizes = [29, 8], strides = [1, 1]} : vector<32x8xf32> to vector<29x8xf32>
    %57 = tpu.concatenate %55, %56 in 0 : vector<3x8xf32>, vector<29x8xf32> -> vector<32x8xf32>
    %cst_17 = arith.constant 0.000000e+00 : f32
    %58 = vector.broadcast %cst_17 : f32 to vector<32x8xf32>
    %59 = arith.select %4, %57, %58 : vector<32x8xi1>, vector<32x8xf32>
    %60 = vector.extract_strided_slice %54 {offsets = [3, 0], sizes = [29, 8], strides = [1, 1]} : vector<32x8xf32> to vector<29x8xf32>
    %61 = vector.extract_strided_slice %54 {offsets = [0, 0], sizes = [3, 8], strides = [1, 1]} : vector<32x8xf32> to vector<3x8xf32>
    %62 = tpu.concatenate %60, %61 in 0 : vector<29x8xf32>, vector<3x8xf32> -> vector<32x8xf32>
    %cst_18 = arith.constant 0.000000e+00 : f32
    %63 = vector.broadcast %cst_18 : f32 to vector<32x8xf32>
    %64 = arith.select %12, %62, %63 : vector<32x8xi1>, vector<32x8xf32>
    %65 = tpu.concatenate %59, %54, %64 in 1 : vector<32x8xf32>, vector<32x8xf32>, vector<32x8xf32> -> vector<32x24xf32>
    %66 = arith.truncf %65 : vector<32x24xf32> to vector<32x24xbf16>
    %c32 = arith.constant 32 : index
    %c0_19 = arith.constant 0 : index
    %67 = vector.load %arg2[%c32, %c0_19] : memref<224x128xbf16, #tpu.memory_space<vmem>>, vector<24x8xbf16>
    %cst_20 = arith.constant dense<0.000000e+00> : vector<32x8xf32>
    %68 = tpu.matmul %66, %67, %cst_20 {dimension_numbers = #tpu.dot_dimension_numbers<[1], [0], [0], [1], [0, 0, 1, 1], [], []>} : vector<32x24xbf16>, vector<24x8xbf16>, vector<32x8xf32> -> vector<32x8xf32>
    %cst_21 = arith.constant 0.000000e+00 : f32
    %69 = vector.broadcast %cst_21 : f32 to vector<32x8xf32>
    %70 = arith.cmpf ogt, %68, %69 : vector<32x8xf32>
    %cst_22 = arith.constant 0.000000e+00 : f32
    %71 = vector.broadcast %cst_22 : f32 to vector<32x8xf32>
    %72 = arith.minimumf %68, %71 : vector<32x8xf32>
    %73 = math.exp %72 : vector<32x8xf32>
    %cst_23 = arith.constant 1.000000e+00 : f32
    %74 = vector.broadcast %cst_23 : f32 to vector<32x8xf32>
    %75 = arith.subf %73, %74 : vector<32x8xf32>
    %76 = arith.select %70, %68, %75 : vector<32x8xi1>, vector<32x8xf32>
    %77 = arith.truncf %76 : vector<32x8xf32> to vector<32x8xbf16>
    %c96 = arith.constant 96 : index
    %c0_24 = arith.constant 0 : index
    %78 = vector.load %arg2[%c96, %c0_24] : memref<224x128xbf16, #tpu.memory_space<vmem>>, vector<8x8xbf16>
    %cst_25 = arith.constant dense<0.000000e+00> : vector<32x8xf32>
    %79 = tpu.matmul %77, %78, %cst_25 {dimension_numbers = #tpu.dot_dimension_numbers<[1], [0], [0], [1], [0, 0, 1, 1], [], []>} : vector<32x8xbf16>, vector<8x8xbf16>, vector<32x8xf32> -> vector<32x8xf32>
    %80 = arith.addf %46, %79 : vector<32x8xf32>
    %c128 = arith.constant 128 : index
    %c0_26 = arith.constant 0 : index
    %81 = vector.load %arg2[%c128, %c0_26] : memref<224x128xbf16, #tpu.memory_space<vmem>>, vector<32x16xbf16>
    %82 = vector.extract_strided_slice %80 {offsets = [31, 0], sizes = [1, 8], strides = [1, 1]} : vector<32x8xf32> to vector<1x8xf32>
    %83 = vector.extract_strided_slice %80 {offsets = [0, 0], sizes = [31, 8], strides = [1, 1]} : vector<32x8xf32> to vector<31x8xf32>
    %84 = tpu.concatenate %82, %83 in 0 : vector<1x8xf32>, vector<31x8xf32> -> vector<32x8xf32>
    %cst_27 = arith.constant 0.000000e+00 : f32
    %85 = vector.broadcast %cst_27 : f32 to vector<32x8xf32>
    %86 = arith.select %6, %84, %85 : vector<32x8xi1>, vector<32x8xf32>
    %87 = vector.extract_strided_slice %80 {offsets = [1, 0], sizes = [31, 8], strides = [1, 1]} : vector<32x8xf32> to vector<31x8xf32>
    %88 = vector.extract_strided_slice %80 {offsets = [0, 0], sizes = [1, 8], strides = [1, 1]} : vector<32x8xf32> to vector<1x8xf32>
    %89 = tpu.concatenate %87, %88 in 0 : vector<31x8xf32>, vector<1x8xf32> -> vector<32x8xf32>
    %cst_28 = arith.constant 0.000000e+00 : f32
    %90 = vector.broadcast %cst_28 : f32 to vector<32x8xf32>
    %91 = arith.select %8, %89, %90 : vector<32x8xi1>, vector<32x8xf32>
    %92 = vector.extract_strided_slice %80 {offsets = [2, 0], sizes = [30, 8], strides = [1, 1]} : vector<32x8xf32> to vector<30x8xf32>
    %93 = vector.extract_strided_slice %80 {offsets = [0, 0], sizes = [2, 8], strides = [1, 1]} : vector<32x8xf32> to vector<2x8xf32>
    %94 = tpu.concatenate %92, %93 in 0 : vector<30x8xf32>, vector<2x8xf32> -> vector<32x8xf32>
    %cst_29 = arith.constant 0.000000e+00 : f32
    %95 = vector.broadcast %cst_29 : f32 to vector<32x8xf32>
    %96 = arith.select %10, %94, %95 : vector<32x8xi1>, vector<32x8xf32>
    %97 = tpu.concatenate %86, %80, %91, %96 in 1 : vector<32x8xf32>, vector<32x8xf32>, vector<32x8xf32>, vector<32x8xf32> -> vector<32x32xf32>
    %98 = arith.truncf %97 : vector<32x32xf32> to vector<32x32xbf16>
    %cst_30 = arith.constant dense<0.000000e+00> : vector<32x16xf32>
    %99 = tpu.matmul %98, %81, %cst_30 {dimension_numbers = #tpu.dot_dimension_numbers<[1], [0], [0], [1], [0, 0, 1, 1], [], []>} : vector<32x32xbf16>, vector<32x16xbf16>, vector<32x16xf32> -> vector<32x16xf32>
    %c160 = arith.constant 160 : index
    %c0_31 = arith.constant 0 : index
    %100 = vector.load %arg2[%c160, %c0_31] : memref<224x128xbf16, #tpu.memory_space<vmem>>, vector<16x32xbf16>
    %101 = arith.extf %100 : vector<16x32xbf16> to vector<16x32xf32>
    %cst_32 = arith.constant dense<0.000000e+00> : vector<16x16xf32>
    %102 = tpu.matmul %101, %99, %cst_32 {dimension_numbers = #tpu.dot_dimension_numbers<[1], [0], [0], [1], [0, 0, 1, 1], [], []>} : vector<16x32xf32>, vector<32x16xf32>, vector<16x16xf32> -> vector<16x16xf32>
    %c192 = arith.constant 192 : index
    %c0_33 = arith.constant 0 : index
    %103 = vector.load %arg2[%c192, %c0_33] : memref<224x128xbf16, #tpu.memory_space<vmem>>, vector<1x16xbf16>
    %104 = arith.extf %103 : vector<1x16xbf16> to vector<1x16xf32>
    %105 = vector.broadcast %104 : vector<1x16xf32> to vector<16x16xf32>
    %106 = arith.addf %102, %105 : vector<16x16xf32>
    %c0_34 = arith.constant 0 : index
    %c0_35 = arith.constant 0 : index
    %c0_36 = arith.constant 0 : index
    %107 = vector.load %arg3[%c0_34, %c0_35, %c0_36] : memref<1x16x16xf32, #tpu.memory_space<vmem>>, vector<1x16x16xf32>
    %108 = vector.shape_cast %107 : vector<1x16x16xf32> to vector<16x16xf32>
    %109 = vector.shape_cast %106 : vector<16x16xf32> to vector<1x16x16xf32>
    tpu.vector_store %arg3[%c0_34, %c0_35, %c0_36], %109 {strides = array<i32>} : memref<1x16x16xf32, #tpu.memory_space<vmem>>, vector<1x16x16xf32>,
    return
  }
  func.func @transform_0(%arg0: i32) -> (i32, i32, i32) {
    %c0_i32 = arith.constant 0 : i32
    %c0_i32_0 = arith.constant 0 : i32
    %c0_i32_1 = arith.constant 0 : i32
    return %arg0, %c0_i32, %c0_i32_0 : i32, i32, i32
  }
  func.func @transform_1(%arg0: i32) -> (i32, i32) {
    %c0_i32 = arith.constant 0 : i32
    %c0_i32_0 = arith.constant 0 : i32
    %c0_i32_1 = arith.constant 0 : i32
    return %c0_i32, %c0_i32_0 : i32, i32
  }
  func.func @transform_2(%arg0: i32) -> (i32, i32, i32) {
    %c0_i32 = arith.constant 0 : i32
    %c0_i32_0 = arith.constant 0 : i32
    %c0_i32_1 = arith.constant 0 : i32
    return %arg0, %c0_i32, %c0_i32_0 : i32, i32, i32
  }
}

</mosaic_0001>

<llo_original>
// kernel: tpu_custom_call.1
$region0: #{tpu_custom_call.1}
  #allocation0 [shape = 'u32[]', space=smem, size = 0x4, offset = 0x4, fixed_abs, tag = 'smem constant byte address 0x4 - core index']
  #allocation1 [shape = 'u32[72,128]{1,0:T(1,128)}', space=vmem, size = 0x9000, scoped, tag = 'internal scratch']
  %s0 = inlined_call_operand.vmem [shape: f32[2,32,8], index: 0, kind: input, shape index: {}]
  %s1 = inlined_call_operand.hbm [shape: bf16[224,128], index: 1, kind: input, shape index: {}]
  %s2 = inlined_call_operand.hbm [shape: f32[2,16,16], index: 2, kind: output, shape index: {}]
  %s3 = sld [smem:[#allocation0]]
  $region45: #{tpu_custom_call.1} parent=0
    _
  %s5 = ssub.s32 1, %s3
  %s6 = scalar_select 0, %s5, %s3
  $region1: #{tpu_custom_call.1} parent=0
    #allocation2 [shape = 'u8[57344]{0}', space=vmem, size = 0xe000, scoped, tag = 'input window, operand 1, single buffered']
    #allocation3 [shape = 's32[2]{0}', space=sflag, size = 0x8, scoped, tag = 'scoped memory for tpu_custom_call.1']
    #allocation4 [shape = 's32[2]{0}', space=sflag, size = 0x8, scoped, tag = 'scoped memory for tpu_custom_call.1']
    #allocation5 [shape = 'u8[16384]{0}', space=vmem, size = 0x4000, scoped, tag = 'output window, operand 0']
    %7 = vsyncpa [#allocation3], 0
    %8 = vsyncpa [#allocation4], 0
    %s9 = scalar_lea.sflag [#allocation4], 1
    %10 = vsyncpa %s9, 0
    loop: start=0, step=1, limit=4
    $region2: #{tpu_custom_call.1} parent=1 // loop_pre_header
      _
    $region3: #{tpu_custom_call.1} parent=1 // loop_header
      %s12 = sphi 0, %s16
      %p13 = scmp.ge.s32.totalorder %s12, 4
      %s22 = sphi 0, %s24
      %s25 = sphi 0, %s22
      %s26 = sphi 0, %s25
      %s42 = sphi 0, %s26
      %s46 = sphi 0, %s46
      %s48 = sphi 0, %s46
      %s49 = sphi 0, %s48
      %s63 = sphi 0, %s49
      %s69 = sphi 0, %s71
      %s72 = sphi 0, %s69
      %s73 = sphi 0, %s72
      %s89 = sphi 0, %s73
    $region4: #{tpu_custom_call.1} parent=1 // loop_header_branch
      %15 = sbr.rel (%p13) target = $region8
    $region5: #{tpu_custom_call.1} parent=1 // loop_body
      %s17 = ssub.s32 %s12, 1
      %s18 = ssub.s32 %s12, 2
      %s19 = sadd.s32 %s12, 1
      %s20 = ssub.s32 %s12, %s19
      %p21 = scmp.eq.s32.totalorder %s20, 0
      %s23 = sadd.s32 %s22, 1
      %s24 = scalar_select %p21, %s22, %s23
      %p27 = pneg %p21
      %p28 = scmp.eq.s32.totalorder %s12, 1
      %p29 = por %p27, %p28
      %p30 = scmp.ne.s32.totalorder %s22, %s25
      %p31 = scmp.eq.s32.totalorder %s12, 0
      %p32 = por %p30, %p31
      %p33 = scmp.ne.s32.totalorder %s22, %s25
      %p34 = scmp.eq.s32.totalorder %s17, 1
      %p35 = por %p33, %p34
      %p36 = scmp.ne.s32.totalorder %s25, %s26
      %p37 = scmp.eq.s32.totalorder %s17, 0
      %p38 = por %p36, %p37
      %p39 = scmp.ne.s32.totalorder %s25, %s26
      %p40 = scmp.eq.s32.totalorder %s18, 1
      %p41 = por %p39, %p40
      %p43 = scmp.ne.s32.totalorder %s26, %s42
      %p44 = scmp.eq.s32.totalorder %s18, 0
      %p45 = por %p43, %p44
      %s47 = sadd.s32 %s46, 1
      %p50 = scmp.eq.s32.totalorder %s12, 1
      %p51 = scmp.ne.s32.totalorder %s46, %s48
      %p52 = scmp.eq.s32.totalorder %s12, 0
      %p53 = por %p51, %p52
      %p54 = scmp.ne.s32.totalorder %s46, %s48
      %p55 = scmp.eq.s32.totalorder %s17, 1
      %p56 = por %p54, %p55
      %p57 = scmp.ne.s32.totalorder %s48, %s49
      %p58 = scmp.eq.s32.totalorder %s17, 0
      %p59 = por %p57, %p58
      %p60 = scmp.ne.s32.totalorder %s48, %s49
      %p61 = scmp.eq.s32.totalorder %s18, 1
      %p62 = por %p60, %p61
      %p64 = scmp.ne.s32.totalorder %s49, %s63
      %p65 = scmp.eq.s32.totalorder %s18, 0
      %p66 = por %p64, %p65
      %s67 = ssub.s32 %s12, %s19
      %p68 = scmp.eq.s32.totalorder %s67, 0
      %s70 = sadd.s32 %s69, 1
      %s71 = scalar_select %p68, %s69, %s70
      %p74 = pneg %p68
      %p75 = scmp.eq.s32.totalorder %s12, 1
      %p76 = por %p74, %p75
      %p77 = scmp.ne.s32.totalorder %s69, %s72
      %p78 = scmp.eq.s32.totalorder %s12, 0
      %p79 = por %p77, %p78
      %p80 = scmp.ne.s32.totalorder %s69, %s72
      %p81 = scmp.eq.s32.totalorder %s17, 1
      %p82 = por %p80, %p81
      %p83 = scmp.ne.s32.totalorder %s72, %s73
      %p84 = scmp.eq.s32.totalorder %s17, 0
      %p85 = por %p83, %p84
      %p86 = scmp.ne.s32.totalorder %s72, %s73
      %p87 = scmp.eq.s32.totalorder %s18, 1
      %p88 = por %p86, %p87
      %p90 = scmp.ne.s32.totalorder %s73, %s89
      %p91 = scmp.eq.s32.totalorder %s18, 0
      %p92 = por %p90, %p91
      %p93 = scmp.le.s32.totalorder 1, %s12
      %p94 = scmp.lt.s32.totalorder %s12, 3
      %p95 = pnand %p93, %p94
      %p96 = pneg %p95
      // Predicated region
      $region9: #{tpu_custom_call.1} parent=5 // pred_check
        _
      $region10: #{tpu_custom_call.1} parent=5 // pred_check_branch
        %98 = sbr.rel (%p95) target = $region12
      $region11: #{tpu_custom_call.1} parent=5 // pred_region
        %s99 = ssub.s32 %s12, 1
        // Predicated region
        $region13: #{tpu_custom_call.1} parent=11 // pred_check
          %p100 = pneg %p59
        $region14: #{tpu_custom_call.1} parent=11 // pred_check_branch
          %102 = sbr.rel (%p100) target = $region16
        $region15: #{tpu_custom_call.1} parent=11 // pred_region
          %104 = vsyncadd [#allocation3], 0
          %s105 = sshll.u32 %s1, 4
          %s106 = int_to_ptr.hbm [resolvable:$true] %s105
          %s107 = sshll.u32 [#allocation2], 4
          %s108 = int_to_ptr.vmem [resolvable:$true] %s107
          %113 = dma.hbm_to_vmem [thread:$0]  %s106, 1792, %s108, [#allocation3], 64, 64, 4
        $region16: #{tpu_custom_call.1} parent=11 // pred_fallthru
          _
      $region12: #{tpu_custom_call.1} parent=5 // pred_fallthru
        _
      %p114 = scmp.lt.s32.totalorder %s12, 2
      // Predicated region
      $region17: #{tpu_custom_call.1} parent=5 // pred_check
        %p115 = pneg %p114
      $region18: #{tpu_custom_call.1} parent=5 // pred_check_branch
        %117 = sbr.rel (%p115) target = $region20
      $region19: #{tpu_custom_call.1} parent=5 // pred_region
        // Predicated region
        $region21: #{tpu_custom_call.1} parent=19 // pred_check
          %p118 = pneg %p32
        $region22: #{tpu_custom_call.1} parent=19 // pred_check_branch
          %120 = sbr.rel (%p118) target = $region24
        $region23: #{tpu_custom_call.1} parent=19 // pred_region
          %p121 = scmp.lt.s32.totalorder %s12, 1
          %s122 = scalar_select %p121, %s12, 1
          %s123 = smul.addr %s122, 4
          %s124 = smul.addr %s123, 8
          %s125 = scalar_lea.vmem %s0, %s124
        $region24: #{tpu_custom_call.1} parent=19 // pred_fallthru
          _
      $region20: #{tpu_custom_call.1} parent=5 // pred_fallthru
        _
      %p126 = scmp.le.s32.totalorder 1, %s12
      %p127 = scmp.lt.s32.totalorder %s12, 3
      %p128 = pnand %p126, %p127
      %p129 = pneg %p128
      // Predicated region
      $region25: #{tpu_custom_call.1} parent=5 // pred_check
        _
      $region26: #{tpu_custom_call.1} parent=5 // pred_check_branch
        %131 = sbr.rel (%p128) target = $region28
      $region27: #{tpu_custom_call.1} parent=5 // pred_region
        %s132 = ssub.s32 %s12, 1
        // Predicated region
        $region29: #{tpu_custom_call.1} parent=27 // pred_check
          %p133 = pneg %p59
        $region30: #{tpu_custom_call.1} parent=27 // pred_check_branch
          %135 = sbr.rel (%p133) target = $region32
        $region31: #{tpu_custom_call.1} parent=27 // pred_region
          %137 = dma.done [#allocation3], 1792
        $region32: #{tpu_custom_call.1} parent=27 // pred_fallthru
          _
        %p138 = scmp.lt.s32.totalorder %s17, 1
        %s139 = scalar_select %p138, %s17, 1
        %s140 = smul.addr %s139, 4
        %s141 = smul.addr %s140, 8
        %s142 = scalar_lea.vmem %s0, %s141
        %p143 = pneg %p38
        %p144 = pneg %p35
        %p145 = pneg %p59
        %p146 = pneg %p56
        %p147 = pneg %p85
        %p148 = pneg %p82
        %s149 = sand.u32 %s72, 1
        %s150 = scalar_lea.sflag [#allocation4], %s149
        %s151 = sand.u32 %s72, 1
        %s152 = smul.addr %s151, 16
        %s153 = scalar_lea.vmem [#allocation5], %s152
        %p154 = scmp.lt.s32.totalorder %s17, 1
        %s155 = scalar_select %p154, %s17, 1
        %s156 = smul.addr %s155, 4
        %s157 = smul.addr %s156, 8
        %s158 = scalar_lea.vmem %s0, %s157
        %v160 = vld [vmem:[%s158] sm:$0xff]
        %v161 = vld [vmem:[%s158 + $0x8] sm:$0xff]
        %v162 = vld [vmem:[%s158 + $0x10] sm:$0xff]
        %v163 = vld [vmem:[%s158 + $0x18] sm:$0xff]
        %v164 = vlaneseq
        %v165 = vshrl.u32 %v164, 7
        %v166 = vadd.s32 %v165, 8
        %v167 = vadd.s32 %v165, 16
        %v168 = vadd.s32 %v165, 24
        %vm169 = vcmp.ge.s32.totalorder %v165, 3
        %vm170 = vcmp.ge.s32.totalorder %v166, 3
        %vm171 = vcmp.ge.s32.totalorder %v167, 3
        %vm172 = vcmp.ge.s32.totalorder %v168, 3
        %vm173 = vcmp.ge.s32.totalorder %v165, 1
        %vm174 = vcmp.ge.s32.totalorder %v166, 1
        %vm175 = vcmp.ge.s32.totalorder %v167, 1
        %vm176 = vcmp.ge.s32.totalorder %v168, 1
        %vm177 = vcmp.lt.s32.totalorder %v165, 31
        %vm178 = vcmp.lt.s32.totalorder %v166, 31
        %vm179 = vcmp.lt.s32.totalorder %v167, 31
        %vm180 = vcmp.lt.s32.totalorder %v168, 31
        %vm181 = vcmp.lt.s32.totalorder %v165, 30
        %vm182 = vcmp.lt.s32.totalorder %v166, 30
        %vm183 = vcmp.lt.s32.totalorder %v167, 30
        %vm184 = vcmp.lt.s32.totalorder %v168, 30
        %vm185 = vcmp.lt.s32.totalorder %v165, 29
        %vm186 = vcmp.lt.s32.totalorder %v166, 29
        %vm187 = vcmp.lt.s32.totalorder %v167, 29
        %vm188 = vcmp.lt.s32.totalorder %v168, 29
        %vm189 = vcmp.gt.f32.partialorder %v160, 0.0
        %vm190 = vcmp.gt.f32.partialorder %v161, 0.0
        %vm191 = vcmp.gt.f32.partialorder %v162, 0.0
        %vm192 = vcmp.gt.f32.partialorder %v163, 0.0
        %v193 = vmin.f32 %v160, 0.0
        %v194 = vmin.f32 %v161, 0.0
        %v195 = vmin.f32 %v162, 0.0
        %v196 = vmin.f32 %v163, 0.0
        %v197 = vmul.f32 %v193, 1.442695
        %v198 = vpow.pop %v197
        %v199 = vmul.f32 %v194, 1.442695
        %v200 = vpow.pop %v199
        %v201 = vmul.f32 %v195, 1.442695
        %v202 = vpow.pop %v201
        %v203 = vmul.f32 %v196, 1.442695
        %v204 = vpow.pop %v203
        %v205 = vsub.f32 %v198, 1.0
        %v206 = vsub.f32 %v200, 1.0
        %v207 = vsub.f32 %v202, 1.0
        %v208 = vsub.f32 %v204, 1.0
        %v209 = vsel %vm189, %v160, %v205
        %v210 = vsel %vm190, %v161, %v206
        %v211 = vsel %vm191, %v162, %v207
        %v212 = vsel %vm192, %v163, %v208
        %v214 = vrot.slane %v212, 7
        %vm219 = vcmask 1040384
        %v220 = vrot.slane %v209, 7
        %v221 = vrot.slane %v210, 7
        %v222 = vsel %vm219, %v220, %v221
        %v223 = vrot.slane %v211, 7
        %v224 = vsel %vm219, %v221, %v223
        %v225 = vsel %vm219, %v223, %v214
        %v230 = vsel %vm219, %v214, %v220
        %v231 = vsel %vm173, %v230, 0.0
        %v232 = vsel %vm174, %v222, 0.0
        %v233 = vsel %vm175, %v224, 0.0
        %v234 = vsel %vm176, %v225, 0.0
        %vm235 = vcmask 1046528
        %v236 = vrot.slane %v209, 1
        %v237 = vrot.slane %v210, 1
        %v238 = vsel %vm235, %v236, %v237
        %v239 = vrot.slane %v211, 1
        %v240 = vsel %vm235, %v237, %v239
        %v241 = vrot.slane %v212, 1
        %v242 = vsel %vm235, %v239, %v241
        %v248 = vsel %vm235, %v241, %v236
        %v249 = vsel %vm177, %v238, 0.0
        %v250 = vsel %vm178, %v240, 0.0
        %v251 = vsel %vm179, %v242, 0.0
        %v252 = vsel %vm180, %v248, 0.0
        %253 = vrot.lane.b32.xlu0 %v209, 8
        %v254 = vpop.permute.xlu0 %253
        %255 = vrot.lane.b32.xlu0 %v210, 8
        %v256 = vpop.permute.xlu0 %255
        %257 = vrot.lane.b32.xlu0 %v211, 8
        %v258 = vpop.permute.xlu0 %257
        %259 = vrot.lane.b32.xlu0 %v212, 8
        %v260 = vpop.permute.xlu0 %259
        %269 = vrot.lane.b32.xlu0 %v249, 16
        %v270 = vpop.permute.xlu0 %269
        %271 = vrot.lane.b32.xlu0 %v250, 16
        %v272 = vpop.permute.xlu0 %271
        %273 = vrot.lane.b32.xlu0 %v251, 16
        %v274 = vpop.permute.xlu0 %273
        %275 = vrot.lane.b32.xlu0 %v252, 16
        %v276 = vpop.permute.xlu0 %275
        %vm281 = vcmask 64512
        %v282 = vsel %vm281, %v231, %v254
        %v283 = vsel %vm281, %v232, %v256
        %v284 = vsel %vm281, %v233, %v258
        %v285 = vsel %vm281, %v234, %v260
        %vm286 = vcmask 130048
        %v287 = vsel %vm286, %v282, %v270
        %v288 = vsel %vm286, %v283, %v272
        %v289 = vsel %vm286, %v284, %v274
        %v290 = vsel %vm286, %v285, %v276
        %v291 = vpack.c.bf16 %v288, %v287
        %v292 = vpack.c.bf16 %v290, %v289
        %v293 = vld [vmem:[#allocation2] sm:$0xf]
        %v294 = vld [vmem:[#allocation2 + $0x4] sm:$0xf]
        %v295 = vld [vmem:[#allocation2 + $0x8] sm:$0xf]
        %v299 = vunpack.c.l.b16 %v293
        %v300 = vunpack.c.l.b16 %v294
        %v301 = vunpack.c.l.b16 %v295
        %v302 = vpack.c.b16 %v300, %v299
        %v303 = vpack.c.b16 %v301, %v301
        %vm305 = vcmask 195584
        %v307 = vsel %vm305, %v291, 0
        %v310 = vsel %vm305, %v292, 0
        %vm312 = vcmask 1043456
        %v314 = vsel %vm312, %v303, 0
        %316 = vmatpush.bf16.msra.mxu0 0
        %317 = vmatpush.bf16.msra.mxu0 0
        %318 = vmatpush.bf16.msra.mxu0 0
        %319 = vmatpush.bf16.msra.mxu0 0
        %320 = vmatpush.bf16.msra.mxu0 0
        %321 = vmatpush.bf16.msra.mxu0 0
        %322 = vmatpush.bf16.msra.mxu0 %v314
        %323 = vmatpush.bf16.msra.mxu0 %v302
        %324 = vmatmul.bf16.gmra.mxu0 %v307
        %v325 = vpop.f32.mrf.mxu0
        %v326 = vadd.f32 0.0, %v325
        %v327 = vpop.f32.mrf.mxu0
        %v328 = vadd.f32 0.0, %v327
        %329 = vmatmul.bf16.gmra.mxu0 %v310
        %v330 = vpop.f32.mrf.mxu0
        %v331 = vadd.f32 0.0, %v330
        %v332 = vpop.f32.mrf.mxu0
        %v333 = vadd.f32 0.0, %v332
        %334 = vdwg.mxu0
        %vm335 = vcmp.gt.f32.partialorder %v326, 0.0
        %vm336 = vcmp.gt.f32.partialorder %v328, 0.0
        %vm337 = vcmp.gt.f32.partialorder %v331, 0.0
        %vm338 = vcmp.gt.f32.partialorder %v333, 0.0
        %v339 = vmin.f32 %v326, 0.0
        %v340 = vmin.f32 %v328, 0.0
        %v341 = vmin.f32 %v331, 0.0
        %v342 = vmin.f32 %v333, 0.0
        %v343 = vmul.f32 %v339, 1.442695
        %v344 = vpow.pop %v343
        %v345 = vmul.f32 %v340, 1.442695
        %v346 = vpow.pop %v345
        %v347 = vmul.f32 %v341, 1.442695
        %v348 = vpow.pop %v347
        %v349 = vmul.f32 %v342, 1.442695
        %v350 = vpow.pop %v349
        %v351 = vsub.f32 %v344, 1.0
        %v352 = vsub.f32 %v346, 1.0
        %v353 = vsub.f32 %v348, 1.0
        %v354 = vsub.f32 %v350, 1.0
        %v355 = vsel %vm335, %v326, %v351
        %v356 = vsel %vm336, %v328, %v352
        %v357 = vsel %vm337, %v331, %v353
        %v358 = vsel %vm338, %v333, %v354
        %v359 = vpack.c.bf16 %v356, %v355
        %v360 = vpack.c.bf16 %v358, %v357
        %v361 = vld [vmem:[#allocation2 + $0x20] sm:$0xf]
        %v363 = vsel %vm281, %v359, 0
        %v366 = vsel %vm281, %v360, 0
        %v369 = vsel %vm312, %v361, 0
        %371 = vmatpush.bf16.msra.mxu0 0
        %372 = vmatpush.bf16.msra.mxu0 0
        %373 = vmatpush.bf16.msra.mxu0 0
        %374 = vmatpush.bf16.msra.mxu0 0
        %375 = vmatpush.bf16.msra.mxu0 0
        %376 = vmatpush.bf16.msra.mxu0 0
        %377 = vmatpush.bf16.msra.mxu0 0
        %378 = vmatpush.bf16.msra.mxu0 %v369
        %379 = vmatmul.bf16.gmra.mxu0 %v363
        %v380 = vpop.f32.mrf.mxu0
        %v381 = vadd.f32 0.0, %v380
        %v382 = vpop.f32.mrf.mxu0
        %v383 = vadd.f32 0.0, %v382
        %384 = vmatmul.bf16.gmra.mxu0 %v366
        %v385 = vpop.f32.mrf.mxu0
        %v386 = vadd.f32 0.0, %v385
        %v387 = vpop.f32.mrf.mxu0
        %v388 = vadd.f32 0.0, %v387
        %389 = vdwg.mxu0
        %v390 = vadd.f32 %v160, %v381
        %v391 = vadd.f32 %v161, %v383
        %v392 = vadd.f32 %v162, %v386
        %v393 = vadd.f32 %v163, %v388
        %vm394 = vcmp.gt.f32.partialorder %v390, 0.0
        %vm395 = vcmp.gt.f32.partialorder %v391, 0.0
        %vm396 = vcmp.gt.f32.partialorder %v392, 0.0
        %vm397 = vcmp.gt.f32.partialorder %v393, 0.0
        %v398 = vmin.f32 %v390, 0.0
        %v399 = vmin.f32 %v391, 0.0
        %v400 = vmin.f32 %v392, 0.0
        %v401 = vmin.f32 %v393, 0.0
        %v402 = vmul.f32 %v398, 1.442695
        %v403 = vpow.pop %v402
        %v404 = vmul.f32 %v399, 1.442695
        %v405 = vpow.pop %v404
        %v406 = vmul.f32 %v400, 1.442695
        %v407 = vpow.pop %v406
        %v408 = vmul.f32 %v401, 1.442695
        %v409 = vpow.pop %v408
        %v410 = vsub.f32 %v403, 1.0
        %v411 = vsub.f32 %v405, 1.0
        %v412 = vsub.f32 %v407, 1.0
        %v413 = vsub.f32 %v409, 1.0
        %v414 = vsel %vm394, %v390, %v410
        %v415 = vsel %vm395, %v391, %v411
        %v416 = vsel %vm396, %v392, %v412
        %v417 = vsel %vm397, %v393, %v413
        %v419 = vrot.slane %v417, 5
        %vm424 = vcmask 1042432
        %v425 = vrot.slane %v414, 5
        %v426 = vrot.slane %v415, 5
        %v427 = vsel %vm424, %v425, %v426
        %v428 = vrot.slane %v416, 5
        %v429 = vsel %vm424, %v426, %v428
        %v430 = vsel %vm424, %v428, %v419
        %v435 = vsel %vm424, %v419, %v425
        %v436 = vsel %vm169, %v435, 0.0
        %v437 = vsel %vm170, %v427, 0.0
        %v438 = vsel %vm171, %v429, 0.0
        %v439 = vsel %vm172, %v430, 0.0
        %vm440 = vcmask 1044480
        %v441 = vrot.slane %v414, 3
        %v442 = vrot.slane %v415, 3
        %v443 = vsel %vm440, %v441, %v442
        %v444 = vrot.slane %v416, 3
        %v445 = vsel %vm440, %v442, %v444
        %v446 = vrot.slane %v417, 3
        %v447 = vsel %vm440, %v444, %v446
        %v453 = vsel %vm440, %v446, %v441
        %v454 = vsel %vm185, %v443, 0.0
        %v455 = vsel %vm186, %v445, 0.0
        %v456 = vsel %vm187, %v447, 0.0
        %v457 = vsel %vm188, %v453, 0.0
        %458 = vrot.lane.b32.xlu0 %v414, 8
        %v459 = vpop.permute.xlu0 %458
        %460 = vrot.lane.b32.xlu0 %v415, 8
        %v461 = vpop.permute.xlu0 %460
        %462 = vrot.lane.b32.xlu0 %v416, 8
        %v463 = vpop.permute.xlu0 %462
        %464 = vrot.lane.b32.xlu0 %v417, 8
        %v465 = vpop.permute.xlu0 %464
        %474 = vrot.lane.b32.xlu0 %v454, 16
        %v475 = vpop.permute.xlu0 %474
        %476 = vrot.lane.b32.xlu0 %v455, 16
        %v477 = vpop.permute.xlu0 %476
        %478 = vrot.lane.b32.xlu0 %v456, 16
        %v479 = vpop.permute.xlu0 %478
        %480 = vrot.lane.b32.xlu0 %v457, 16
        %v481 = vpop.permute.xlu0 %480
        %v486 = vsel %vm281, %v436, %v459
        %v487 = vsel %vm281, %v437, %v461
        %v488 = vsel %vm281, %v438, %v463
        %v489 = vsel %vm281, %v439, %v465
        %v490 = vsel %vm286, %v486, %v475
        %v491 = vsel %vm286, %v487, %v477
        %v492 = vsel %vm286, %v488, %v479
        %v493 = vsel %vm286, %v489, %v481
        %v494 = vpack.c.bf16 %v491, %v490
        %v495 = vpack.c.bf16 %v493, %v492
        %v496 = vld [vmem:[#allocation2 + $0x10] sm:$0xf]
        %v497 = vld [vmem:[#allocation2 + $0x14] sm:$0xf]
        %v498 = vld [vmem:[#allocation2 + $0x18] sm:$0xf]
        %v502 = vunpack.c.l.b16 %v496
        %v503 = vunpack.c.l.b16 %v497
        %v504 = vunpack.c.l.b16 %v498
        %v505 = vpack.c.b16 %v503, %v502
        %v506 = vpack.c.b16 %v504, %v504
        %v509 = vsel %vm305, %v494, 0
        %v512 = vsel %vm305, %v495, 0
        %v515 = vsel %vm312, %v506, 0
        %517 = vmatpush.bf16.msra.mxu0 0
        %518 = vmatpush.bf16.msra.mxu0 0
        %519 = vmatpush.bf16.msra.mxu0 0
        %520 = vmatpush.bf16.msra.mxu0 0
        %521 = vmatpush.bf16.msra.mxu0 0
        %522 = vmatpush.bf16.msra.mxu0 0
        %523 = vmatpush.bf16.msra.mxu0 %v515
        %524 = vmatpush.bf16.msra.mxu0 %v505
        %525 = vmatmul.bf16.gmra.mxu0 %v509
        %v526 = vpop.f32.mrf.mxu0
        %v527 = vadd.f32 0.0, %v526
        %v528 = vpop.f32.mrf.mxu0
        %v529 = vadd.f32 0.0, %v528
        %530 = vmatmul.bf16.gmra.mxu0 %v512
        %v531 = vpop.f32.mrf.mxu0
        %v532 = vadd.f32 0.0, %v531
        %v533 = vpop.f32.mrf.mxu0
        %v534 = vadd.f32 0.0, %v533
        %535 = vdwg.mxu0
        %vm536 = vcmp.gt.f32.partialorder %v527, 0.0
        %vm537 = vcmp.gt.f32.partialorder %v529, 0.0
        %vm538 = vcmp.gt.f32.partialorder %v532, 0.0
        %vm539 = vcmp.gt.f32.partialorder %v534, 0.0
        %v540 = vmin.f32 %v527, 0.0
        %v541 = vmin.f32 %v529, 0.0
        %v542 = vmin.f32 %v532, 0.0
        %v543 = vmin.f32 %v534, 0.0
        %v544 = vmul.f32 %v540, 1.442695
        %v545 = vpow.pop %v544
        %v546 = vmul.f32 %v541, 1.442695
        %v547 = vpow.pop %v546
        %v548 = vmul.f32 %v542, 1.442695
        %v549 = vpow.pop %v548
        %v550 = vmul.f32 %v543, 1.442695
        %v551 = vpow.pop %v550
        %v552 = vsub.f32 %v545, 1.0
        %v553 = vsub.f32 %v547, 1.0
        %v554 = vsub.f32 %v549, 1.0
        %v555 = vsub.f32 %v551, 1.0
        %v556 = vsel %vm536, %v527, %v552
        %v557 = vsel %vm537, %v529, %v553
        %v558 = vsel %vm538, %v532, %v554
        %v559 = vsel %vm539, %v534, %v555
        %v560 = vpack.c.bf16 %v557, %v556
        %v561 = vpack.c.bf16 %v559, %v558
        %v562 = vld [vmem:[#allocation2 + $0x30] sm:$0xf]
        %v564 = vsel %vm281, %v560, 0
        %v567 = vsel %vm281, %v561, 0
        %v570 = vsel %vm312, %v562, 0
        %572 = vmatpush.bf16.msra.mxu0 0
        %573 = vmatpush.bf16.msra.mxu0 0
        %574 = vmatpush.bf16.msra.mxu0 0
        %575 = vmatpush.bf16.msra.mxu0 0
        %576 = vmatpush.bf16.msra.mxu0 0
        %577 = vmatpush.bf16.msra.mxu0 0
        %578 = vmatpush.bf16.msra.mxu0 0
        %579 = vmatpush.bf16.msra.mxu0 %v570
        %580 = vmatmul.bf16.gmra.mxu0 %v564
        %v581 = vpop.f32.mrf.mxu0
        %v582 = vadd.f32 0.0, %v581
        %v583 = vpop.f32.mrf.mxu0
        %v584 = vadd.f32 0.0, %v583
        %585 = vmatmul.bf16.gmra.mxu0 %v567
        %v586 = vpop.f32.mrf.mxu0
        %v587 = vadd.f32 0.0, %v586
        %v588 = vpop.f32.mrf.mxu0
        %v589 = vadd.f32 0.0, %v588
        %590 = vdwg.mxu0
        %v591 = vadd.f32 %v390, %v582
        %v592 = vadd.f32 %v391, %v584
        %v593 = vadd.f32 %v392, %v587
        %v594 = vadd.f32 %v393, %v589
        %v595 = vld [vmem:[#allocation2 + $0x40] sm:$0xf]
        %v596 = vld [vmem:[#allocation2 + $0x44] sm:$0xf]
        %v597 = vld [vmem:[#allocation2 + $0x48] sm:$0xf]
        %v598 = vld [vmem:[#allocation2 + $0x4c] sm:$0xf]
        %v600 = vrot.slane %v594, 7
        %v605 = vrot.slane %v591, 7
        %v606 = vrot.slane %v592, 7
        %v607 = vsel %vm219, %v605, %v606
        %v608 = vrot.slane %v593, 7
        %v609 = vsel %vm219, %v606, %v608
        %v610 = vsel %vm219, %v608, %v600
        %v615 = vsel %vm219, %v600, %v605
        %v616 = vsel %vm173, %v615, 0.0
        %v617 = vsel %vm174, %v607, 0.0
        %v618 = vsel %vm175, %v609, 0.0
        %v619 = vsel %vm176, %v610, 0.0
        %v620 = vrot.slane %v591, 1
        %v621 = vrot.slane %v592, 1
        %v622 = vsel %vm235, %v620, %v621
        %v623 = vrot.slane %v593, 1
        %v624 = vsel %vm235, %v621, %v623
        %v625 = vrot.slane %v594, 1
        %v626 = vsel %vm235, %v623, %v625
        %v632 = vsel %vm235, %v625, %v620
        %v633 = vsel %vm177, %v622, 0.0
        %v634 = vsel %vm178, %v624, 0.0
        %v635 = vsel %vm179, %v626, 0.0
        %v636 = vsel %vm180, %v632, 0.0
        %vm637 = vcmask 1045504
        %v638 = vrot.slane %v591, 2
        %v639 = vrot.slane %v592, 2
        %v640 = vsel %vm637, %v638, %v639
        %v641 = vrot.slane %v593, 2
        %v642 = vsel %vm637, %v639, %v641
        %v643 = vrot.slane %v594, 2
        %v644 = vsel %vm637, %v641, %v643
        %v650 = vsel %vm637, %v643, %v638
        %v651 = vsel %vm181, %v640, 0.0
        %v652 = vsel %vm182, %v642, 0.0
        %v653 = vsel %vm183, %v644, 0.0
        %v654 = vsel %vm184, %v650, 0.0
        %655 = vrot.lane.b32.xlu0 %v591, 8
        %v656 = vpop.permute.xlu0 %655
        %657 = vrot.lane.b32.xlu0 %v592, 8
        %v658 = vpop.permute.xlu0 %657
        %659 = vrot.lane.b32.xlu0 %v593, 8
        %v660 = vpop.permute.xlu0 %659
        %661 = vrot.lane.b32.xlu0 %v594, 8
        %v662 = vpop.permute.xlu0 %661
        %671 = vrot.lane.b32.xlu0 %v633, 16
        %v672 = vpop.permute.xlu0 %671
        %673 = vrot.lane.b32.xlu0 %v634, 16
        %v674 = vpop.permute.xlu0 %673
        %675 = vrot.lane.b32.xlu0 %v635, 16
        %v676 = vpop.permute.xlu0 %675
        %677 = vrot.lane.b32.xlu0 %v636, 16
        %v678 = vpop.permute.xlu0 %677
        %687 = vrot.lane.b32.xlu0 %v651, 24
        %v688 = vpop.permute.xlu0 %687
        %689 = vrot.lane.b32.xlu0 %v652, 24
        %v690 = vpop.permute.xlu0 %689
        %691 = vrot.lane.b32.xlu0 %v653, 24
        %v692 = vpop.permute.xlu0 %691
        %693 = vrot.lane.b32.xlu0 %v654, 24
        %v694 = vpop.permute.xlu0 %693
        %v699 = vsel %vm281, %v616, %v656
        %v700 = vsel %vm281, %v617, %v658
        %v701 = vsel %vm281, %v618, %v660
        %v702 = vsel %vm281, %v619, %v662
        %v703 = vsel %vm286, %v699, %v672
        %v704 = vsel %vm286, %v700, %v674
        %v705 = vsel %vm286, %v701, %v676
        %v706 = vsel %vm286, %v702, %v678
        %v707 = vsel %vm305, %v703, %v688
        %v708 = vsel %vm305, %v704, %v690
        %v709 = vsel %vm305, %v705, %v692
        %v710 = vsel %vm305, %v706, %v694
        %v711 = vpack.c.bf16 %v708, %v707
        %v712 = vpack.c.bf16 %v710, %v709
        %v717 = vunpack.c.l.b16 %v595
        %v718 = vunpack.c.l.b16 %v596
        %v719 = vunpack.c.l.b16 %v597
        %v720 = vunpack.c.l.b16 %v598
        %v721 = vpack.c.b16 %v718, %v717
        %v722 = vpack.c.b16 %v720, %v719
        %vm725 = vcmask 261120
        %v727 = vsel %vm725, %v711, 0
        %v730 = vsel %vm725, %v712, 0
        %732 = vmatpush.bf16.msra.mxu0 0
        %733 = vmatpush.bf16.msra.mxu0 0
        %734 = vmatpush.bf16.msra.mxu0 0
        %735 = vmatpush.bf16.msra.mxu0 0
        %736 = vmatpush.bf16.msra.mxu0 0
        %737 = vmatpush.bf16.msra.mxu0 0
        %738 = vmatpush.bf16.msra.mxu0 %v722
        %739 = vmatpush.bf16.msra.mxu0 %v721
        %740 = vmatmul.bf16.gmra.mxu0 %v727
        %v741 = vpop.f32.mrf.mxu0
        %v742 = vadd.f32 0.0, %v741
        %v743 = vpop.f32.mrf.mxu0
        %v744 = vadd.f32 0.0, %v743
        %745 = vmatmul.bf16.gmra.mxu0 %v730
        %v746 = vpop.f32.mrf.mxu0
        %v747 = vadd.f32 0.0, %v746
        %v748 = vpop.f32.mrf.mxu0
        %v749 = vadd.f32 0.0, %v748
        %750 = vdwg.mxu0
        %v751 = vld [vmem:[#allocation2 + $0x50] sm:$0xf]
        %v752 = vld [vmem:[#allocation2 + $0x54] sm:$0xf]
        %v753 = vunpack.c.l.bf16 %v751
        %v754 = vunpack.c.l.bf16 %v752
        %v755 = vld [vmem:[#allocation2 + $0x60] sm:$0x1]
        %v756 = vunpack.c.l.bf16 %v755
        %v757 = vperm.slane %v756, 0
        %v759 = vsel %vm725, %v753, 0
        %v762 = vsel %vm725, %v754, 0
        %764 = vmatpush.msra.mxu0 0.0
        %765 = vmatpush.msra.mxu0 0.0
        %766 = vmatpush.msra.mxu0 0.0
        %767 = vmatpush.msra.mxu0 0.0
        %768 = vmatpush.msra.mxu0 0.0
        %769 = vmatpush.msra.mxu0 0.0
        %770 = vmatpush.msra.mxu0 0.0
        %771 = vmatpush.msra.mxu0 0.0
        %772 = vmatpush.msra.mxu0 0.0
        %773 = vmatpush.msra.mxu0 0.0
        %774 = vmatpush.msra.mxu0 0.0
        %775 = vmatpush.msra.mxu0 0.0
        %776 = vmatpush.msra.mxu0 %v749
        %777 = vmatpush.msra.mxu0 %v747
        %778 = vmatpush.msra.mxu0 %v744
        %779 = vmatpush.msra.mxu0 %v742
        %780 = vmatmul.f32.gmra.mxu0 %v759
        %v781 = vpop.f32.mrf.mxu0
        %v782 = vadd.f32 %v757, %v781
        %783 = vmatmul.f32.gmra.mxu0 %v762
        %v784 = vpop.f32.mrf.mxu0
        %v785 = vadd.f32 %v757, %v784
        %786 = vdwg.mxu0
        %787 = vst.msk [vmem:[%s153] sm:$0xff] %vm286, %v782
        %788 = vst.msk [vmem:[%s153 + $0x8] sm:$0xff] %vm286, %v785
        %s789 = sand.u32 %s72, 1
        %s790 = scalar_lea.sflag [#allocation4], %s789
        %s791 = sand.u32 %s72, 1
        %s792 = smul.addr %s791, 16
        %s793 = scalar_lea.vmem [#allocation5], %s792
        // Predicated region
        $region33: #{tpu_custom_call.1} parent=27 // pred_check
          %p794 = pneg %p82
        $region34: #{tpu_custom_call.1} parent=27 // pred_check_branch
          %796 = sbr.rel (%p794) target = $region36
        $region35: #{tpu_custom_call.1} parent=27 // pred_region
          %798 = vsyncadd %s790, 0
          %s799 = smul.addr %s17, 2
          %s800 = smul.addr %s799, 8
          %s801 = scalar_lea.hbm %s2, %s800
          %s802 = sshll.u32 %s793, 4
          %s803 = int_to_ptr.vmem [resolvable:$true] %s802
          %s804 = sshll.u32 %s801, 4
          %s805 = int_to_ptr.hbm [resolvable:$true] %s804
          %810 = dma.vmem_to_hbm [thread:$0]  %s803, 256, %s805, %s790, 128, 128, 8
        $region36: #{tpu_custom_call.1} parent=27 // pred_fallthru
          _
      $region28: #{tpu_custom_call.1} parent=5 // pred_fallthru
        _
      %p811 = scmp.le.s32.totalorder 2, %s12
      // Predicated region
      $region37: #{tpu_custom_call.1} parent=5 // pred_check
        %p812 = pneg %p811
      $region38: #{tpu_custom_call.1} parent=5 // pred_check_branch
        %814 = sbr.rel (%p812) target = $region40
      $region39: #{tpu_custom_call.1} parent=5 // pred_region
        %s815 = ssub.s32 %s12, 2
        // Predicated region
        $region41: #{tpu_custom_call.1} parent=39 // pred_check
          %p816 = pneg %p88
        $region42: #{tpu_custom_call.1} parent=39 // pred_check_branch
          %818 = sbr.rel (%p816) target = $region44
        $region43: #{tpu_custom_call.1} parent=39 // pred_region
          %s819 = sand.u32 %s73, 1
          %s820 = scalar_lea.sflag [#allocation4], %s819
          %s821 = sand.u32 %s73, 1
          %s822 = smul.addr %s821, 16
          %s823 = scalar_lea.vmem [#allocation5], %s822
          %825 = dma.done %s820, 256
        $region44: #{tpu_custom_call.1} parent=39 // pred_fallthru
          _
      $region40: #{tpu_custom_call.1} parent=5 // pred_fallthru
        _
    $region6: #{tpu_custom_call.1} parent=1 // loop_footer
      %s16 = sadd.s32 1, %s12
    $region7: #{tpu_custom_call.1} parent=1 // loop_footer_branch
      %11 = sbr.rel target = $region3
    $region8: #{tpu_custom_call.1} parent=1 // loop_exit
      _
    %826 = vsyncpa [#allocation3], 1
    %s827 = scalar_lea.sflag [#allocation3], 1
    %828 = vsyncpa %s827, 1
    %829 = vsyncpa [#allocation4], 1
    %s830 = scalar_lea.sflag [#allocation4], 1
    %831 = vsyncpa %s830, 1

</llo_original>
